<compile_context>
chip_gen: v7x
topology: tpu7x:2x2x1
jax: 0.10.0
libtpu: 0.0.40
codegen_flags: <defaults>
</compile_context>

<pallas_src>
import functools

import jax
import jax.numpy as jnp
from jax import lax
from jax.experimental import pallas as pl
from jax.experimental.pallas import tpu as pltpu


def _round_up(x, m):
    return ((x + m - 1) // m) * m


def _plan_tiles(t, dilation, n_batch, max_tile):
    """Pick a lane-aligned T tile and the (zero-)padded T it implies."""
    d = dilation
    # Halos are taken from the immediately adjacent tile only -> tile > d.
    min_tile = _round_up(d + 1, 128)
    tile = min(_round_up(t, 128), max(_round_up(max_tile, 128), 128))
    tile = max(tile, min_tile)
    # Dual-TensorCore chips (v7x): make sure batch-1 calls still get >= 2
    # grid points by splitting T when it would otherwise be a single tile.
    if n_batch == 1 and _round_up(t, 128) <= tile and tile >= 2 * min_tile:
        tile = max(_round_up(tile // 2, 128), min_tile)
    t_pad = _round_up(max(t, 1), tile)
    return tile, t_pad


def _dilated_residual_kernel(x_ref, halo_ref, wd_ref, bd_ref, w1_ref, b1_ref,
                             o_ref, *, dilation, t_tile):
    d = dilation

    x = x_ref[0]                                  # (C_in, T_tile), input dtype
    xb = x.astype(jnp.bfloat16)                   # bf16 matmul operand

    halo = halo_ref[0, 0]                         # (C_in, 2*d) bf16
    lh = halo[:, :d]                              # left halo  (cols [-d, 0))
    rh = halo[:, d:]                              # right halo (cols [T, T+d))

    # Shifted taps built as values; no VMEM work-buffer round trip.
    tap_l = jnp.concatenate([lh, xb[:, :t_tile - d]], axis=1)   # x[t - d]
    tap_r = jnp.concatenate([xb[:, d:], rh], axis=1)            # x[t + d]

    # Dilated k=3 conv: centre tap straight from the resident x block.
    acc = jnp.dot(wd_ref[1], xb, preferred_element_type=jnp.float32)
    acc = acc + jnp.dot(wd_ref[0], tap_l, preferred_element_type=jnp.float32)
    acc = acc + jnp.dot(wd_ref[2], tap_r, preferred_element_type=jnp.float32)

    h = jnp.maximum(acc + bd_ref[...], 0.0).astype(jnp.bfloat16)   # bias + ReLU

    # 1x1 conv == channel matmul + bias (f32 accumulation).
    out = jnp.dot(w1_ref[...], h, preferred_element_type=jnp.float32) + b1_ref[...]

    # TODO(synk): nn.Dropout() is identity in eval mode; training-mode
    # stochastic dropout is not implemented here.
    o_ref[0] = (x.astype(jnp.float32) + out).astype(o_ref.dtype)


def dilated_residual_layer(x_nct, w_dil_oik, b_dil, w_1x1_oi, b_1x1, *,
                           dilation, kernel_size=3, max_t_tile=8192):
    """Forward pass of DilatedResidualLayer (causal_conv=False), NCT layout.

    Args:
      x_nct:     (N, C, T) input (PyTorch Conv1d layout, kept as-is).
      w_dil_oik: (C_out, C_in, K) dilated conv weight (torch layout).
      b_dil:     (C_out,) dilated conv bias.
      w_1x1_oi:  (C_out, C_in) 1x1 conv weight (torch (C_out, C_in, 1) squeezed).
      b_1x1:     (C_out,) 1x1 conv bias.
    Returns:
      (N, C, T) output = x + conv_1x1(relu(conv_dilated(x))).
    """
    assert kernel_size == 3, "non-causal DilatedResidualLayer assumes kernel_size=3"
    n, c_in, t = x_nct.shape
    c_out = w_1x1_oi.shape[0]
    assert c_in == c_out, "residual add requires in_channels == out_channels"
    d = int(dilation)

    tile, t_pad = _plan_tiles(t, d, n, max_t_tile)
    num_tiles = t_pad // tile

    # Lane-aligned zero padding of T (== the conv's zero padding on the right;
    # sliced off again below).  No-op when T already divides the tile.
    x_in = x_nct if t_pad == t else jnp.pad(x_nct, ((0, 0), (0, 0), (0, t_pad - t)))

    # Packed per-tile halos: one tiny (N, num_tiles, C, 2*d) bf16 side input.
    # Columns [:d] = left halo, [d:] = right halo; zeros at sequence ends
    # reproduce the conv's zero padding.
    if num_tiles == 1:
        halos = jnp.zeros((n, 1, c_in, 2 * d), jnp.bfloat16)
    else:
        xr = x_in.reshape(n, c_in, num_tiles, tile)
        zc = jnp.zeros((n, c_in, 1, d), x_in.dtype)
        l_src = jnp.concatenate([zc, xr[:, :, :-1, tile - d:]], axis=2)
        r_src = jnp.concatenate([xr[:, :, 1:, :d], zc], axis=2)
        halos = jnp.concatenate([l_src, r_src], axis=3)            # (n, C, nt, 2d)
        halos = jnp.transpose(halos, (0, 2, 1, 3)).astype(jnp.bfloat16)

    # Weights in kernel-friendly layouts, cast once to bf16 (tiny, one-time).
    w_dil_koi = jnp.transpose(w_dil_oik, (2, 0, 1)).astype(jnp.bfloat16)  # (K, C_out, C_in)
    w_1x1_bf = w_1x1_oi.astype(jnp.bfloat16)
    b_dil2 = b_dil.reshape(c_out, 1).astype(jnp.float32)
    b_1x12 = b_1x1.reshape(c_out, 1).astype(jnp.float32)

    kern = functools.partial(_dilated_residual_kernel, dilation=d, t_tile=tile)

    itemsize = int(jnp.dtype(x_nct.dtype).itemsize)
    flops = int(2 * n * t_pad * (kernel_size * c_in * c_out + c_in * c_out))
    bytes_accessed = int(n * (c_in + c_out) * t_pad * itemsize
                         + n * num_tiles * c_in * 2 * d * 2
                         + (kernel_size + 1) * c_out * c_in * 2
                         + 2 * c_out * 4)

    out = pl.pallas_call(
        kern,
        out_shape=jax.ShapeDtypeStruct((n, c_out, t_pad), x_nct.dtype),
        grid_spec=pltpu.PrefetchScalarGridSpec(
            num_scalar_prefetch=0,
            grid=(n, num_tiles),
            in_specs=[
                pl.BlockSpec((1, c_in, tile), lambda b, j: (b, 0, j)),        # x tile (also residual)
                pl.BlockSpec((1, 1, c_in, 2 * d), lambda b, j: (b, j, 0, 0)), # packed halos
                pl.BlockSpec((kernel_size, c_out, c_in), lambda b, j: (0, 0, 0)),
                pl.BlockSpec((c_out, 1), lambda b, j: (0, 0)),
                pl.BlockSpec((c_out, c_in), lambda b, j: (0, 0)),
                pl.BlockSpec((c_out, 1), lambda b, j: (0, 0)),
            ],
            out_specs=pl.BlockSpec((1, c_out, tile), lambda b, j: (b, 0, j)),
        ),
        compiler_params=pltpu.CompilerParams(
            dimension_semantics=("parallel", "parallel")),
        cost_estimate=pl.CostEstimate(flops=flops, transcendentals=0,
                                      bytes_accessed=bytes_accessed),
    )(x_in, halos, w_dil_koi, b_dil2, w_1x1_bf, b_1x12)

    return out if t_pad == t else out[:, :, :t]


def _reference(x_nct, w_dil_oik, b_dil, w_1x1_oi, b_1x1, *, dilation):
    """Independent pure-JAX reference via lax.conv_general_dilated (f32)."""
    out = lax.conv_general_dilated(
        x_nct, w_dil_oik, window_strides=(1,),
        padding=[(dilation, dilation)], rhs_dilation=(dilation,),
        dimension_numbers=("NCH", "OIH", "NCH"))
    out = out + b_dil.reshape(1, -1, 1)
    out = jnp.maximum(out, 0.0)
    out = lax.conv_general_dilated(
        out, w_1x1_oi[:, :, None], window_strides=(1,), padding=[(0, 0)],
        dimension_numbers=("NCH", "OIH", "NCH"))
    out = out + b_1x1.reshape(1, -1, 1)
    return x_nct + out


def _check(n, c, t, dilation, key, max_t_tile=8192):
    k_x, k_wd, k_bd, k_w1, k_b1 = jax.random.split(key, 5)
    x = jax.random.normal(k_x, (n, c, t), dtype=jnp.float32)
    w_dil = 0.1 * jax.random.normal(k_wd, (c, c, 3), dtype=jnp.float32)   # torch (C_out, C_in, K)
    b_dil = 0.1 * jax.random.normal(k_bd, (c,), dtype=jnp.float32)
    w_1x1 = 0.1 * jax.random.normal(k_w1, (c, c), dtype=jnp.float32)      # torch (C_out, C_in, 1) squeezed
    b_1x1 = 0.1 * jax.random.normal(k_b1, (c,), dtype=jnp.float32)

    out = dilated_residual_layer(x, w_dil, b_dil, w_1x1, b_1x1,
                                 dilation=dilation, max_t_tile=max_t_tile)
    out = jax.block_until_ready(out)
    ref = _reference(x, w_dil, b_dil, w_1x1, b_1x1, dilation=dilation)
    assert out.shape == (n, c, t)
    # bf16 matmul operands with f32 accumulation -> ~1e-2 absolute agreement.
    assert jnp.allclose(out, ref, atol=3e-2, rtol=3e-2), "mismatch vs reference"


if __name__ == "__main__":
    key = jax.random.PRNGKey(0)
    k1, k2, k3 = jax.random.split(key, 3)

    # Small single-tile case (module-sized toy shapes; T padded to one lane tile).
    _check(n=2, c=4, t=16, dilation=2, key=k1)
    # Multi-tile case that exercises the cross-tile halo path.
    _check(n=2, c=4, t=256, dilation=4, key=k2, max_t_tile=128)
    # Batch-1 case exercising the dual-TensorCore T split and non-128-multiple T.
    _check(n=1, c=8, t=300, dilation=3, key=k3)

    print("KERNEL_OK")
</pallas_src>

<mosaic_0001>
module attributes {stable_mosaic.version = 11 : i64} {
  func.func @_dilated_residual_kernel(%arg0: i32, %arg1: i32, %arg2: memref<1x4x128xf32, #tpu.memory_space<vmem>>, %arg3: memref<1x1x4x4xbf16, #tpu.memory_space<vmem>>, %arg4: memref<3x4x4xbf16, #tpu.memory_space<vmem>>, %arg5: memref<4x1xf32, #tpu.memory_space<vmem>>, %arg6: memref<4x4xbf16, #tpu.memory_space<vmem>>, %arg7: memref<4x1xf32, #tpu.memory_space<vmem>>, %arg8: memref<1x4x128xf32, #tpu.memory_space<vmem>>) attributes {dimension_semantics = [#tpu.dimension_semantics<parallel>, #tpu.dimension_semantics<parallel>], iteration_bounds = array<i64: 2, 1>, scalar_prefetch = 0 : i64, scratch_operands = 0 : i64, tpu.core_type = #tpu.core_type<tc>, window_params = [{transform_indices = @transform_0, window_bounds = array<i64: 1, 4, 128>}, {transform_indices = @transform_1, window_bounds = array<i64: 1, 1, 4, 4>}, {pipeline_mode = #tpu.pipeline_mode<synchronous>, transform_indices = @transform_2, window_bounds = array<i64: 3, 4, 4>}, {pipeline_mode = #tpu.pipeline_mode<synchronous>, transform_indices = @transform_3, window_bounds = array<i64: 4, 1>}, {pipeline_mode = #tpu.pipeline_mode<synchronous>, transform_indices = @transform_4, window_bounds = array<i64: 4, 4>}, {pipeline_mode = #tpu.pipeline_mode<synchronous>, transform_indices = @transform_5, window_bounds = array<i64: 4, 1>}, {transform_indices = @transform_6, window_bounds = array<i64: 1, 4, 128>}]} {
    %c0 = arith.constant 0 : index
    %c0_0 = arith.constant 0 : index
    %c0_1 = arith.constant 0 : index
    %0 = vector.load %arg2[%c0, %c0_0, %c0_1] : memref<1x4x128xf32, #tpu.memory_space<vmem>>, vector<1x4x128xf32>
    %1 = vector.shape_cast %0 : vector<1x4x128xf32> to vector<4x128xf32>
    %2 = arith.truncf %1 : vector<4x128xf32> to vector<4x128xbf16>
    %c0_2 = arith.constant 0 : index
    %c0_3 = arith.constant 0 : index
    %c0_4 = arith.constant 0 : index
    %c0_5 = arith.constant 0 : index
    %3 = vector.load %arg3[%c0_2, %c0_3, %c0_4, %c0_5] : memref<1x1x4x4xbf16, #tpu.memory_space<vmem>>, vector<1x1x4x4xbf16>
    %4 = vector.shape_cast %3 : vector<1x1x4x4xbf16> to vector<4x4xbf16>
    %5 = vector.extract_strided_slice %4 {offsets = [0, 0], sizes = [4, 2], strides = [1, 1]} : vector<4x4xbf16> to vector<4x2xbf16>
    %6 = vector.extract_strided_slice %4 {offsets = [0, 2], sizes = [4, 2], strides = [1, 1]} : vector<4x4xbf16> to vector<4x2xbf16>
    %7 = vector.extract_strided_slice %2 {offsets = [0, 0], sizes = [4, 126], strides = [1, 1]} : vector<4x128xbf16> to vector<4x126xbf16>
    %8 = tpu.concatenate %5, %7 in 1 : vector<4x2xbf16>, vector<4x126xbf16> -> vector<4x128xbf16>
    %9 = vector.extract_strided_slice %2 {offsets = [0, 2], sizes = [4, 126], strides = [1, 1]} : vector<4x128xbf16> to vector<4x126xbf16>
    %10 = tpu.concatenate %9, %6 in 1 : vector<4x126xbf16>, vector<4x2xbf16> -> vector<4x128xbf16>
    %c1 = arith.constant 1 : index
    %c0_6 = arith.constant 0 : index
    %c0_7 = arith.constant 0 : index
    %11 = vector.load %arg4[%c1, %c0_6, %c0_7] : memref<3x4x4xbf16, #tpu.memory_space<vmem>>, vector<1x4x4xbf16>
    %12 = vector.shape_cast %11 : vector<1x4x4xbf16> to vector<4x4xbf16>
    %cst = arith.constant dense<0.000000e+00> : vector<4x128xf32>
    %13 = tpu.matmul %12, %2, %cst {dimension_numbers = #tpu.dot_dimension_numbers<[1], [0], [0], [1], [0, 0, 1, 1], [], []>} : vector<4x4xbf16>, vector<4x128xbf16>, vector<4x128xf32> -> vector<4x128xf32>
    %c0_8 = arith.constant 0 : index
    %c0_9 = arith.constant 0 : index
    %c0_10 = arith.constant 0 : index
    %14 = vector.load %arg4[%c0_8, %c0_9, %c0_10] : memref<3x4x4xbf16, #tpu.memory_space<vmem>>, vector<1x4x4xbf16>
    %15 = vector.shape_cast %14 : vector<1x4x4xbf16> to vector<4x4xbf16>
    %cst_11 = arith.constant dense<0.000000e+00> : vector<4x128xf32>
    %16 = tpu.matmul %15, %8, %cst_11 {dimension_numbers = #tpu.dot_dimension_numbers<[1], [0], [0], [1], [0, 0, 1, 1], [], []>} : vector<4x4xbf16>, vector<4x128xbf16>, vector<4x128xf32> -> vector<4x128xf32>
    %17 = arith.addf %13, %16 : vector<4x128xf32>
    %c2 = arith.constant 2 : index
    %c0_12 = arith.constant 0 : index
    %c0_13 = arith.constant 0 : index
    %18 = vector.load %arg4[%c2, %c0_12, %c0_13] : memref<3x4x4xbf16, #tpu.memory_space<vmem>>, vector<1x4x4xbf16>
    %19 = vector.shape_cast %18 : vector<1x4x4xbf16> to vector<4x4xbf16>
    %cst_14 = arith.constant dense<0.000000e+00> : vector<4x128xf32>
    %20 = tpu.matmul %19, %10, %cst_14 {dimension_numbers = #tpu.dot_dimension_numbers<[1], [0], [0], [1], [0, 0, 1, 1], [], []>} : vector<4x4xbf16>, vector<4x128xbf16>, vector<4x128xf32> -> vector<4x128xf32>
    %21 = arith.addf %17, %20 : vector<4x128xf32>
    %c0_15 = arith.constant 0 : index
    %c0_16 = arith.constant 0 : index
    %22 = vector.load %arg5[%c0_15, %c0_16] : memref<4x1xf32, #tpu.memory_space<vmem>>, vector<4x1xf32>
    %23 = vector.broadcast %22 : vector<4x1xf32> to vector<4x128xf32>
    %24 = arith.addf %21, %23 : vector<4x128xf32>
    %cst_17 = arith.constant 0.000000e+00 : f32
    %25 = vector.broadcast %cst_17 : f32 to vector<4x128xf32>
    %26 = arith.maximumf %24, %25 : vector<4x128xf32>
    %27 = arith.truncf %26 : vector<4x128xf32> to vector<4x128xbf16>
    %c0_18 = arith.constant 0 : index
    %c0_19 = arith.constant 0 : index
    %28 = vector.load %arg6[%c0_18, %c0_19] : memref<4x4xbf16, #tpu.memory_space<vmem>>, vector<4x4xbf16>
    %cst_20 = arith.constant dense<0.000000e+00> : vector<4x128xf32>
    %29 = tpu.matmul %28, %27, %cst_20 {dimension_numbers = #tpu.dot_dimension_numbers<[1], [0], [0], [1], [0, 0, 1, 1], [], []>} : vector<4x4xbf16>, vector<4x128xbf16>, vector<4x128xf32> -> vector<4x128xf32>
    %c0_21 = arith.constant 0 : index
    %c0_22 = arith.constant 0 : index
    %30 = vector.load %arg7[%c0_21, %c0_22] : memref<4x1xf32, #tpu.memory_space<vmem>>, vector<4x1xf32>
    %31 = vector.broadcast %30 : vector<4x1xf32> to vector<4x128xf32>
    %32 = arith.addf %29, %31 : vector<4x128xf32>
    %33 = arith.addf %1, %32 : vector<4x128xf32>
    %c0_23 = arith.constant 0 : index
    %c0_24 = arith.constant 0 : index
    %c0_25 = arith.constant 0 : index
    %34 = vector.load %arg8[%c0_23, %c0_24, %c0_25] : memref<1x4x128xf32, #tpu.memory_space<vmem>>, vector<1x4x128xf32>
    %35 = vector.shape_cast %34 : vector<1x4x128xf32> to vector<4x128xf32>
    %36 = vector.shape_cast %33 : vector<4x128xf32> to vector<1x4x128xf32>
    tpu.vector_store %arg8[%c0_23, %c0_24, %c0_25], %36 {strides = array<i32>} : memref<1x4x128xf32, #tpu.memory_space<vmem>>, vector<1x4x128xf32>,
    return
  }
  func.func @transform_0(%arg0: i32, %arg1: i32) -> (i32, i32, i32) {
    %c0_i32 = arith.constant 0 : i32
    %c0_i32_0 = arith.constant 0 : i32
    return %arg0, %c0_i32, %arg1 : i32, i32, i32
  }
  func.func @transform_1(%arg0: i32, %arg1: i32) -> (i32, i32, i32, i32) {
    %c0_i32 = arith.constant 0 : i32
    %c0_i32_0 = arith.constant 0 : i32
    %c0_i32_1 = arith.constant 0 : i32
    return %arg0, %arg1, %c0_i32, %c0_i32_0 : i32, i32, i32, i32
  }
  func.func @transform_2(%arg0: i32, %arg1: i32) -> (i32, i32, i32) {
    %c0_i32 = arith.constant 0 : i32
    %c0_i32_0 = arith.constant 0 : i32
    %c0_i32_1 = arith.constant 0 : i32
    %c0_i32_2 = arith.constant 0 : i32
    return %c0_i32, %c0_i32_0, %c0_i32_1 : i32, i32, i32
  }
  func.func @transform_3(%arg0: i32, %arg1: i32) -> (i32, i32) {
    %c0_i32 = arith.constant 0 : i32
    %c0_i32_0 = arith.constant 0 : i32
    %c0_i32_1 = arith.constant 0 : i32
    return %c0_i32, %c0_i32_0 : i32, i32
  }
  func.func @transform_4(%arg0: i32, %arg1: i32) -> (i32, i32) {
    %c0_i32 = arith.constant 0 : i32
    %c0_i32_0 = arith.constant 0 : i32
    %c0_i32_1 = arith.constant 0 : i32
    return %c0_i32, %c0_i32_0 : i32, i32
  }
  func.func @transform_5(%arg0: i32, %arg1: i32) -> (i32, i32) {
    %c0_i32 = arith.constant 0 : i32
    %c0_i32_0 = arith.constant 0 : i32
    %c0_i32_1 = arith.constant 0 : i32
    return %c0_i32, %c0_i32_0 : i32, i32
  }
  func.func @transform_6(%arg0: i32, %arg1: i32) -> (i32, i32, i32) {
    %c0_i32 = arith.constant 0 : i32
    %c0_i32_0 = arith.constant 0 : i32
    return %arg0, %c0_i32, %arg1 : i32, i32, i32
  }
}

</mosaic_0001>

<llo_original>
// kernel: tpu_custom_call.1
$region0: #{tpu_custom_call.1}
  #allocation0 [shape = 'u32[]', space=smem, size = 0x4, offset = 0x4, fixed_abs, tag = 'smem constant byte address 0x4 - core index']
  #allocation1 [shape = 'u32[144,128]{1,0:T(1,128)}', space=vmem, size = 0x12000, scoped, tag = 'internal scratch']
  %s0 = inlined_call_operand.vmem [shape: f32[2,4,128], index: 0, kind: input, shape index: {}]
  %s1 = inlined_call_operand.hbm [shape: bf16[2,1,4,4], index: 1, kind: input, shape index: {}]
  %s2 = inlined_call_operand.vmem [shape: bf16[3,4,4], index: 2, kind: input, shape index: {}]
  %s3 = inlined_call_operand.vmem [shape: f32[4,1], index: 3, kind: input, shape index: {}]
  %s4 = inlined_call_operand.vmem [shape: bf16[4,4], index: 4, kind: input, shape index: {}]
  %s5 = inlined_call_operand.vmem [shape: f32[4,1], index: 5, kind: input, shape index: {}]
  %s6 = inlined_call_operand.hbm [shape: f32[2,4,128], index: 6, kind: output, shape index: {}]
  %s7 = sld [smem:[#allocation0]]
  $region61: #{tpu_custom_call.1} parent=0
    _
  %s9 = ssub.s32 1, %s7
  %s10 = scalar_select 0, %s9, %s7
  $region1: #{tpu_custom_call.1} parent=0
    #allocation2 [shape = 'u8[2048]{0}', space=vmem, size = 0x800, scoped, tag = 'input window, operand 1']
    #allocation3 [shape = 's32[2]{0}', space=sflag, size = 0x8, scoped, tag = 'scoped memory for tpu_custom_call.1']
    #allocation4 [shape = 's32[2]{0}', space=sflag, size = 0x8, scoped, tag = 'scoped memory for tpu_custom_call.1']
    #allocation5 [shape = 'u8[4096]{0}', space=vmem, size = 0x1000, scoped, tag = 'output window, operand 0']
    %11 = vsyncpa [#allocation3], 0
    %s12 = scalar_lea.sflag [#allocation3], 1
    %13 = vsyncpa %s12, 0
    %14 = vsyncpa [#allocation4], 0
    %s15 = scalar_lea.sflag [#allocation4], 1
    %16 = vsyncpa %s15, 0
    loop: start=0, step=1, limit=4
    $region2: #{tpu_custom_call.1} parent=1 // loop_pre_header
      _
    $region3: #{tpu_custom_call.1} parent=1 // loop_header
      %s18 = sphi 0, %s22
      %p19 = scmp.ge.s32.totalorder %s18, 4
      %s25 = sphi 0, %s37
      %s26 = sphi 0, %s33
      %s27 = sphi 0, %s25
      %s28 = sphi 0, %s26
      %s29 = sphi 0, %s27
      %s30 = sphi 0, %s28
      %s42 = sphi 0, %s44
      %s45 = sphi 0, %s42
      %s46 = sphi 0, %s45
      %s62 = sphi 0, %s46
      %s70 = sphi 0, %s72
      %s73 = sphi 0, %s70
      %s74 = sphi 0, %s73
      %s90 = sphi 0, %s74
      %s94 = sphi 0, %s94
      %s96 = sphi 0, %s94
      %s97 = sphi 0, %s96
      %s111 = sphi 0, %s97
      %s115 = sphi 0, %s115
      %s117 = sphi 0, %s115
      %s118 = sphi 0, %s117
      %s132 = sphi 0, %s118
      %s136 = sphi 0, %s136
      %s138 = sphi 0, %s136
      %s139 = sphi 0, %s138
      %s153 = sphi 0, %s139
      %s157 = sphi 0, %s157
      %s159 = sphi 0, %s157
      %s160 = sphi 0, %s159
      %s174 = sphi 0, %s160
      %s182 = sphi 0, %s184
      %s185 = sphi 0, %s182
      %s186 = sphi 0, %s185
      %s202 = sphi 0, %s186
    $region4: #{tpu_custom_call.1} parent=1 // loop_header_branch
      %21 = sbr.rel (%p19) target = $region8
    $region5: #{tpu_custom_call.1} parent=1 // loop_body
      %s23 = ssub.s32 %s18, 1
      %s24 = ssub.s32 %s18, 2
      %s31 = sadd.s32 1, %s26
      %p32 = scmp.ge.s32.totalorder %s31, 1
      %s33 = scalar_select %p32, 0, %s31
      %s34 = sadd.s32 1, %s25
      %s35 = scalar_select %p32, %s34, %s25
      %p36 = scmp.ge.s32.totalorder %s35, 2
      %s37 = scalar_select %p36, 0, %s35
      %s38 = ssub.s32 %s25, %s37
      %s39 = ssub.s32 %s26, %s33
      %s40 = sor.u32 %s38, %s39
      %p41 = scmp.eq.s32.totalorder %s40, 0
      %s43 = sadd.s32 %s42, 1
      %s44 = scalar_select %p41, %s42, %s43
      %p47 = pneg %p41
      %p48 = scmp.eq.s32.totalorder %s18, 1
      %p49 = por %p47, %p48
      %p50 = scmp.ne.s32.totalorder %s42, %s45
      %p51 = scmp.eq.s32.totalorder %s18, 0
      %p52 = por %p50, %p51
      %p53 = scmp.ne.s32.totalorder %s42, %s45
      %p54 = scmp.eq.s32.totalorder %s23, 1
      %p55 = por %p53, %p54
      %p56 = scmp.ne.s32.totalorder %s45, %s46
      %p57 = scmp.eq.s32.totalorder %s23, 0
      %p58 = por %p56, %p57
      %p59 = scmp.ne.s32.totalorder %s45, %s46
      %p60 = scmp.eq.s32.totalorder %s24, 1
      %p61 = por %p59, %p60
      %p63 = scmp.ne.s32.totalorder %s46, %s62
      %p64 = scmp.eq.s32.totalorder %s24, 0
      %p65 = por %p63, %p64
      %s66 = ssub.s32 %s25, %s37
      %s67 = ssub.s32 %s26, %s33
      %s68 = sor.u32 %s66, %s67
      %p69 = scmp.eq.s32.totalorder %s68, 0
      %s71 = sadd.s32 %s70, 1
      %s72 = scalar_select %p69, %s70, %s71
      %p75 = pneg %p69
      %p76 = scmp.eq.s32.totalorder %s18, 1
      %p77 = por %p75, %p76
      %p78 = scmp.ne.s32.totalorder %s70, %s73
      %p79 = scmp.eq.s32.totalorder %s18, 0
      %p80 = por %p78, %p79
      %p81 = scmp.ne.s32.totalorder %s70, %s73
      %p82 = scmp.eq.s32.totalorder %s23, 1
      %p83 = por %p81, %p82
      %p84 = scmp.ne.s32.totalorder %s73, %s74
      %p85 = scmp.eq.s32.totalorder %s23, 0
      %p86 = por %p84, %p85
      %p87 = scmp.ne.s32.totalorder %s73, %s74
      %p88 = scmp.eq.s32.totalorder %s24, 1
      %p89 = por %p87, %p88
      %p91 = scmp.ne.s32.totalorder %s74, %s90
      %p92 = scmp.eq.s32.totalorder %s24, 0
      %p93 = por %p91, %p92
      %s95 = sadd.s32 %s94, 1
      %p98 = scmp.eq.s32.totalorder %s18, 1
      %p99 = scmp.ne.s32.totalorder %s94, %s96
      %p100 = scmp.eq.s32.totalorder %s18, 0
      %p101 = por %p99, %p100
      %p102 = scmp.ne.s32.totalorder %s94, %s96
      %p103 = scmp.eq.s32.totalorder %s23, 1
      %p104 = por %p102, %p103
      %p105 = scmp.ne.s32.totalorder %s96, %s97
      %p106 = scmp.eq.s32.totalorder %s23, 0
      %p107 = por %p105, %p106
      %p108 = scmp.ne.s32.totalorder %s96, %s97
      %p109 = scmp.eq.s32.totalorder %s24, 1
      %p110 = por %p108, %p109
      %p112 = scmp.ne.s32.totalorder %s97, %s111
      %p113 = scmp.eq.s32.totalorder %s24, 0
      %p114 = por %p112, %p113
      %s116 = sadd.s32 %s115, 1
      %p119 = scmp.eq.s32.totalorder %s18, 1
      %p120 = scmp.ne.s32.totalorder %s115, %s117
      %p121 = scmp.eq.s32.totalorder %s18, 0
      %p122 = por %p120, %p121
      %p123 = scmp.ne.s32.totalorder %s115, %s117
      %p124 = scmp.eq.s32.totalorder %s23, 1
      %p125 = por %p123, %p124
      %p126 = scmp.ne.s32.totalorder %s117, %s118
      %p127 = scmp.eq.s32.totalorder %s23, 0
      %p128 = por %p126, %p127
      %p129 = scmp.ne.s32.totalorder %s117, %s118
      %p130 = scmp.eq.s32.totalorder %s24, 1
      %p131 = por %p129, %p130
      %p133 = scmp.ne.s32.totalorder %s118, %s132
      %p134 = scmp.eq.s32.totalorder %s24, 0
      %p135 = por %p133, %p134
      %s137 = sadd.s32 %s136, 1
      %p140 = scmp.eq.s32.totalorder %s18, 1
      %p141 = scmp.ne.s32.totalorder %s136, %s138
      %p142 = scmp.eq.s32.totalorder %s18, 0
      %p143 = por %p141, %p142
      %p144 = scmp.ne.s32.totalorder %s136, %s138
      %p145 = scmp.eq.s32.totalorder %s23, 1
      %p146 = por %p144, %p145
      %p147 = scmp.ne.s32.totalorder %s138, %s139
      %p148 = scmp.eq.s32.totalorder %s23, 0
      %p149 = por %p147, %p148
      %p150 = scmp.ne.s32.totalorder %s138, %s139
      %p151 = scmp.eq.s32.totalorder %s24, 1
      %p152 = por %p150, %p151
      %p154 = scmp.ne.s32.totalorder %s139, %s153
      %p155 = scmp.eq.s32.totalorder %s24, 0
      %p156 = por %p154, %p155
      %s158 = sadd.s32 %s157, 1
      %p161 = scmp.eq.s32.totalorder %s18, 1
      %p162 = scmp.ne.s32.totalorder %s157, %s159
      %p163 = scmp.eq.s32.totalorder %s18, 0
      %p164 = por %p162, %p163
      %p165 = scmp.ne.s32.totalorder %s157, %s159
      %p166 = scmp.eq.s32.totalorder %s23, 1
      %p167 = por %p165, %p166
      %p168 = scmp.ne.s32.totalorder %s159, %s160
      %p169 = scmp.eq.s32.totalorder %s23, 0
      %p170 = por %p168, %p169
      %p171 = scmp.ne.s32.totalorder %s159, %s160
      %p172 = scmp.eq.s32.totalorder %s24, 1
      %p173 = por %p171, %p172
      %p175 = scmp.ne.s32.totalorder %s160, %s174
      %p176 = scmp.eq.s32.totalorder %s24, 0
      %p177 = por %p175, %p176
      %s178 = ssub.s32 %s25, %s37
      %s179 = ssub.s32 %s26, %s33
      %s180 = sor.u32 %s178, %s179
      %p181 = scmp.eq.s32.totalorder %s180, 0
      %s183 = sadd.s32 %s182, 1
      %s184 = scalar_select %p181, %s182, %s183
      %p187 = pneg %p181
      %p188 = scmp.eq.s32.totalorder %s18, 1
      %p189 = por %p187, %p188
      %p190 = scmp.ne.s32.totalorder %s182, %s185
      %p191 = scmp.eq.s32.totalorder %s18, 0
      %p192 = por %p190, %p191
      %p193 = scmp.ne.s32.totalorder %s182, %s185
      %p194 = scmp.eq.s32.totalorder %s23, 1
      %p195 = por %p193, %p194
      %p196 = scmp.ne.s32.totalorder %s185, %s186
      %p197 = scmp.eq.s32.totalorder %s23, 0
      %p198 = por %p196, %p197
      %p199 = scmp.ne.s32.totalorder %s185, %s186
      %p200 = scmp.eq.s32.totalorder %s24, 1
      %p201 = por %p199, %p200
      %p203 = scmp.ne.s32.totalorder %s186, %s202
      %p204 = scmp.eq.s32.totalorder %s24, 0
      %p205 = por %p203, %p204
      %p206 = scmp.le.s32.totalorder 1, %s18
      %p207 = scmp.lt.s32.totalorder %s18, 3
      %p208 = pnand %p206, %p207
      %p209 = pneg %p208
      // Predicated region
      $region9: #{tpu_custom_call.1} parent=5 // pred_check
        _
      $region10: #{tpu_custom_call.1} parent=5 // pred_check_branch
        %211 = sbr.rel (%p208) target = $region12
      $region11: #{tpu_custom_call.1} parent=5 // pred_region
        %s212 = ssub.s32 %s18, 1
        // Predicated region
        $region13: #{tpu_custom_call.1} parent=11 // pred_check
          %p213 = pneg %p107
        $region14: #{tpu_custom_call.1} parent=11 // pred_check_branch
          %215 = sbr.rel (%p213) target = $region16
        $region15: #{tpu_custom_call.1} parent=11 // pred_region
          _
        $region16: #{tpu_custom_call.1} parent=11 // pred_fallthru
          _
        // Predicated region
        $region17: #{tpu_custom_call.1} parent=11 // pred_check
          %p216 = pneg %p128
        $region18: #{tpu_custom_call.1} parent=11 // pred_check_branch
          %218 = sbr.rel (%p216) target = $region20
        $region19: #{tpu_custom_call.1} parent=11 // pred_region
          _
        $region20: #{tpu_custom_call.1} parent=11 // pred_fallthru
          _
        // Predicated region
        $region21: #{tpu_custom_call.1} parent=11 // pred_check
          %p219 = pneg %p149
        $region22: #{tpu_custom_call.1} parent=11 // pred_check_branch
          %221 = sbr.rel (%p219) target = $region24
        $region23: #{tpu_custom_call.1} parent=11 // pred_region
          _
        $region24: #{tpu_custom_call.1} parent=11 // pred_fallthru
          _
        // Predicated region
        $region25: #{tpu_custom_call.1} parent=11 // pred_check
          %p222 = pneg %p170
        $region26: #{tpu_custom_call.1} parent=11 // pred_check_branch
          %224 = sbr.rel (%p222) target = $region28
        $region27: #{tpu_custom_call.1} parent=11 // pred_region
          _
        $region28: #{tpu_custom_call.1} parent=11 // pred_fallthru
          _
      $region12: #{tpu_custom_call.1} parent=5 // pred_fallthru
        _
      %p225 = scmp.lt.s32.totalorder %s18, 2
      // Predicated region
      $region29: #{tpu_custom_call.1} parent=5 // pred_check
        %p226 = pneg %p225
      $region30: #{tpu_custom_call.1} parent=5 // pred_check_branch
        %228 = sbr.rel (%p226) target = $region32
      $region31: #{tpu_custom_call.1} parent=5 // pred_region
        // Predicated region
        $region33: #{tpu_custom_call.1} parent=31 // pred_check
          %p229 = pneg %p52
        $region34: #{tpu_custom_call.1} parent=31 // pred_check_branch
          %231 = sbr.rel (%p229) target = $region36
        $region35: #{tpu_custom_call.1} parent=31 // pred_region
          %p232 = scmp.lt.s32.totalorder %s25, 1
          %s233 = scalar_select %p232, %s25, 1
          %p234 = scmp.lt.s32.totalorder %s26, 0
          %s235 = scalar_select %p234, %s26, 0
          %s236 = sadd.s32 %s235, %s233
          %s237 = smul.addr %s236, 4
          %s238 = scalar_lea.vmem %s0, %s237
        $region36: #{tpu_custom_call.1} parent=31 // pred_fallthru
          _
        // Predicated region
        $region37: #{tpu_custom_call.1} parent=31 // pred_check
          %p239 = pneg %p80
        $region38: #{tpu_custom_call.1} parent=31 // pred_check_branch
          %241 = sbr.rel (%p239) target = $region40
        $region39: #{tpu_custom_call.1} parent=31 // pred_region
          %s242 = sand.u32 %s70, 1
          %s243 = scalar_lea.sflag [#allocation3], %s242
          %s244 = sand.u32 %s70, 1
          %s245 = smul.addr %s244, 2
          %s246 = scalar_lea.vmem [#allocation2], %s245
          %s248 = ssub.s32 32, 32
          %249 = vsyncadd %s243, %s248
          %s250 = sadd.s32 %s26, %s25
          %s251 = smul.addr %s250, 32
          %s252 = scalar_lea.hbm %s1, %s251
          %s254 = sshll.u32 %s246, 4
          %s255 = int_to_ptr.vmem [resolvable:$true] %s254
          %257 = dma.hbm_to_vmem [thread:$0]  %s252, 32, %s255, %s243
        $region40: #{tpu_custom_call.1} parent=31 // pred_fallthru
          _
      $region32: #{tpu_custom_call.1} parent=5 // pred_fallthru
        _
      %p258 = scmp.le.s32.totalorder 1, %s18
      %p259 = scmp.lt.s32.totalorder %s18, 3
      %p260 = pnand %p258, %p259
      %p261 = pneg %p260
      // Predicated region
      $region41: #{tpu_custom_call.1} parent=5 // pred_check
        _
      $region42: #{tpu_custom_call.1} parent=5 // pred_check_branch
        %263 = sbr.rel (%p260) target = $region44
      $region43: #{tpu_custom_call.1} parent=5 // pred_region
        %s264 = ssub.s32 %s18, 1
        %s265 = sand.u32 %s73, 1
        %s266 = scalar_lea.sflag [#allocation3], %s265
        %s267 = sand.u32 %s73, 1
        %s268 = smul.addr %s267, 2
        %s269 = scalar_lea.vmem [#allocation2], %s268
        // Predicated region
        $region45: #{tpu_custom_call.1} parent=43 // pred_check
          %p270 = pneg %p86
        $region46: #{tpu_custom_call.1} parent=43 // pred_check_branch
          %272 = sbr.rel (%p270) target = $region48
        $region47: #{tpu_custom_call.1} parent=43 // pred_region
          %273 = dma.done %s266, 32
        $region48: #{tpu_custom_call.1} parent=43 // pred_fallthru
          _
        %p274 = scmp.lt.s32.totalorder %s27, 1
        %s275 = scalar_select %p274, %s27, 1
        %p276 = scmp.lt.s32.totalorder %s28, 0
        %s277 = scalar_select %p276, %s28, 0
        %s278 = sadd.s32 %s277, %s275
        %s279 = smul.addr %s278, 4
        %s280 = scalar_lea.vmem %s0, %s279
        %p281 = pneg %p58
        %p282 = pneg %p55
        %s283 = sand.u32 %s73, 1
        %s284 = scalar_lea.sflag [#allocation3], %s283
        %s285 = sand.u32 %s73, 1
        %s286 = smul.addr %s285, 2
        %s287 = scalar_lea.vmem [#allocation2], %s286
        %p288 = pneg %p86
        %p289 = pneg %p83
        %p290 = pneg %p107
        %p291 = pneg %p104
        %p292 = pneg %p128
        %p293 = pneg %p125
        %p294 = pneg %p149
        %p295 = pneg %p146
        %p296 = pneg %p170
        %p297 = pneg %p167
        %p298 = pneg %p198
        %p299 = pneg %p195
        %s300 = sand.u32 %s185, 1
        %s301 = scalar_lea.sflag [#allocation4], %s300
        %s302 = sand.u32 %s185, 1
        %s303 = smul.addr %s302, 4
        %s304 = scalar_lea.vmem [#allocation5], %s303
        %p305 = scmp.lt.s32.totalorder %s27, 1
        %s306 = scalar_select %p305, %s27, 1
        %p307 = scmp.lt.s32.totalorder %s28, 0
        %s308 = scalar_select %p307, %s28, 0
        %s309 = sadd.s32 %s308, %s306
        %s310 = smul.addr %s309, 4
        %s311 = scalar_lea.vmem %s0, %s310
        %v313 = vld [vmem:[%s311] sm:$0xf]
        %v314 = vpack.c.bf16 %v313, %v313
        %v315 = vld [vmem:[%s269] sm:$0x3]
        %317 = vrot.lane.b32.xlu0 %v314, 2
        %v318 = vpop.permute.xlu0 %317
        %vm319 = vcmask 15360
        %v322 = vsel %vm319, %v315, %v318
        %323 = vrot.lane.b32.xlu0 %v314, 126
        %v324 = vpop.permute.xlu0 %323
        %v327 = vunpack.c.l.s4 1983009808
        %v328 = vunpack.c.0.s8 %v327
        %v329 = vlaneseq
        %v330 = vshrl.u32 %v329, 7
        %v331 = vsub.s32 %v328, %v330
        %v332 = vrot.slane %v315, %v331
        %333 = vrot.lane.b32.xlu0 %v332, 124
        %v334 = vpop.permute.xlu0 %333
        %vm335 = vcmask 1031168
        %v338 = vsel %vm335, %v324, %v334
        %s339 = scalar_lea.vmem %s2, 2
        %v340 = vld [vmem:[%s339] sm:$0x3]
        %v341 = vld [vmem:[%s2] sm:$0x3]
        %vm342 = vcmask 31744
        %v344 = vsel %vm342, %v341, 0
        %vm346 = vcmask 1041408
        %v347 = vsel %vm346, %v322, 0
        %349 = vmatprep.subr.bf16.mxu0 0
        %350 = vmatpush1.bf16.msra.mxu0 %v347
        %351 = vmatprep.subr.bf16.mxu0 0
        %352 = vmatpush1.bf16.msra.mxu0 0
        %353 = vmatprep.subr.bf16.mxu0 0
        %354 = vmatpush1.bf16.msra.mxu0 0
        %355 = vmatprep.subr.bf16.mxu0 0
        %356 = vmatpush1.bf16.msra.mxu0 0
        %357 = vmatprep.subr.bf16.mxu0 0
        %358 = vmatpush1.bf16.msra.mxu0 0
        %359 = vmatprep.subr.bf16.mxu0 0
        %360 = vmatpush1.bf16.msra.mxu0 0
        %361 = vmatprep.subr.bf16.mxu0 0
        %362 = vmatpush1.bf16.msra.mxu0 0
        %363 = vmatprep.subr.bf16.mxu0 0
        %364 = vmatpush1.bf16.msra.mxu0 0
        %365 = vmatprep.subr.bf16.mxu0 0
        %366 = vmatpush1.bf16.msra.mxu0 0
        %367 = vmatprep.subr.bf16.mxu0 0
        %368 = vmatpush1.bf16.msra.mxu0 0
        %369 = vmatprep.subr.bf16.mxu0 0
        %370 = vmatpush1.bf16.msra.mxu0 0
        %371 = vmatprep.subr.bf16.mxu0 0
        %372 = vmatpush1.bf16.msra.mxu0 0
        %373 = vmatprep.subr.bf16.mxu0 0
        %374 = vmatpush1.bf16.msra.mxu0 0
        %375 = vmatprep.subr.bf16.mxu0 0
        %376 = vmatpush1.bf16.msra.mxu0 0
        %377 = vmatprep.subr.bf16.mxu0 0
        %378 = vmatpush1.bf16.msra.mxu0 0
        %379 = vmatprep.subr.bf16.mxu0 0
        %380 = vmatpush1.bf16.msra.mxu0 0
        %381 = vmatprep.mubr.bf16.mxu0 0
        %382 = vmatmul.mubr.bf16.gmra.mrb[0].mxu0 %v344
        %v383 = vpop.f32.mrb[0].mxu0
        %v384 = vadd.f32 0.0, %v383
        %v385 = vpop.f32.mrb[0].mxu0
        %v386 = vpop.f32.mrb[0].mxu0
        %v387 = vpop.f32.mrb[0].mxu0
        %388 = vdwg.mxu0
        %v390 = vsel %vm342, %v340, 0
        %v393 = vsel %vm346, %v314, 0
        %395 = vmatprep.subr.bf16.mxu0 0
        %396 = vmatpush1.bf16.msra.mxu0 %v393
        %397 = vmatprep.subr.bf16.mxu0 0
        %398 = vmatpush1.bf16.msra.mxu0 0
        %399 = vmatprep.subr.bf16.mxu0 0
        %400 = vmatpush1.bf16.msra.mxu0 0
        %401 = vmatprep.subr.bf16.mxu0 0
        %402 = vmatpush1.bf16.msra.mxu0 0
        %403 = vmatprep.subr.bf16.mxu0 0
        %404 = vmatpush1.bf16.msra.mxu0 0
        %405 = vmatprep.subr.bf16.mxu0 0
        %406 = vmatpush1.bf16.msra.mxu0 0
        %407 = vmatprep.subr.bf16.mxu0 0
        %408 = vmatpush1.bf16.msra.mxu0 0
        %409 = vmatprep.subr.bf16.mxu0 0
        %410 = vmatpush1.bf16.msra.mxu0 0
        %411 = vmatprep.subr.bf16.mxu0 0
        %412 = vmatpush1.bf16.msra.mxu0 0
        %413 = vmatprep.subr.bf16.mxu0 0
        %414 = vmatpush1.bf16.msra.mxu0 0
        %415 = vmatprep.subr.bf16.mxu0 0
        %416 = vmatpush1.bf16.msra.mxu0 0
        %417 = vmatprep.subr.bf16.mxu0 0
        %418 = vmatpush1.bf16.msra.mxu0 0
        %419 = vmatprep.subr.bf16.mxu0 0
        %420 = vmatpush1.bf16.msra.mxu0 0
        %421 = vmatprep.subr.bf16.mxu0 0
        %422 = vmatpush1.bf16.msra.mxu0 0
        %423 = vmatprep.subr.bf16.mxu0 0
        %424 = vmatpush1.bf16.msra.mxu0 0
        %425 = vmatprep.subr.bf16.mxu0 0
        %426 = vmatpush1.bf16.msra.mxu0 0
        %427 = vmatprep.mubr.bf16.mxu0 0
        %428 = vmatmul.mubr.bf16.gmra.mrb[0].mxu0 %v390
        %v429 = vpop.f32.mrb[0].mxu0
        %v430 = vadd.f32 %v384, %v429
        %v431 = vpop.f32.mrb[0].mxu0
        %v432 = vpop.f32.mrb[0].mxu0
        %v433 = vpop.f32.mrb[0].mxu0
        %434 = vdwg.mxu0
        %s435 = scalar_lea.vmem %s2, 4
        %v436 = vld [vmem:[%s435] sm:$0x3]
        %v438 = vsel %vm342, %v436, 0
        %v440 = vsel %vm346, %v338, 0
        %442 = vmatprep.subr.bf16.mxu0 0
        %443 = vmatpush1.bf16.msra.mxu0 %v440
        %444 = vmatprep.subr.bf16.mxu0 0
        %445 = vmatpush1.bf16.msra.mxu0 0
        %446 = vmatprep.subr.bf16.mxu0 0
        %447 = vmatpush1.bf16.msra.mxu0 0
        %448 = vmatprep.subr.bf16.mxu0 0
        %449 = vmatpush1.bf16.msra.mxu0 0
        %450 = vmatprep.subr.bf16.mxu0 0
        %451 = vmatpush1.bf16.msra.mxu0 0
        %452 = vmatprep.subr.bf16.mxu0 0
        %453 = vmatpush1.bf16.msra.mxu0 0
        %454 = vmatprep.subr.bf16.mxu0 0
        %455 = vmatpush1.bf16.msra.mxu0 0
        %456 = vmatprep.subr.bf16.mxu0 0
        %457 = vmatpush1.bf16.msra.mxu0 0
        %458 = vmatprep.subr.bf16.mxu0 0
        %459 = vmatpush1.bf16.msra.mxu0 0
        %460 = vmatprep.subr.bf16.mxu0 0
        %461 = vmatpush1.bf16.msra.mxu0 0
        %462 = vmatprep.subr.bf16.mxu0 0
        %463 = vmatpush1.bf16.msra.mxu0 0
        %464 = vmatprep.subr.bf16.mxu0 0
        %465 = vmatpush1.bf16.msra.mxu0 0
        %466 = vmatprep.subr.bf16.mxu0 0
        %467 = vmatpush1.bf16.msra.mxu0 0
        %468 = vmatprep.subr.bf16.mxu0 0
        %469 = vmatpush1.bf16.msra.mxu0 0
        %470 = vmatprep.subr.bf16.mxu0 0
        %471 = vmatpush1.bf16.msra.mxu0 0
        %472 = vmatprep.subr.bf16.mxu0 0
        %473 = vmatpush1.bf16.msra.mxu0 0
        %474 = vmatprep.mubr.bf16.mxu0 0
        %475 = vmatmul.mubr.bf16.gmra.mrb[0].mxu0 %v438
        %v476 = vpop.f32.mrb[0].mxu0
        %v477 = vadd.f32 0.0, %v476
        %v478 = vpop.f32.mrb[0].mxu0
        %v479 = vpop.f32.mrb[0].mxu0
        %v480 = vpop.f32.mrb[0].mxu0
        %481 = vdwg.mxu0
        %v482 = vadd.f32 %v430, %v477
        %v483 = vld [vmem:[%s3] sm:$0xf]
        %485 = vset.pattern.permute.xlu0 0
        %486 = vperm.xlu0 %485, %v483
        %v487 = vpop.permute.xlu0 %486
        %v489 = vadd.f32 %v482, %v487
        %v490 = vmax.f32 %v489, 0.0
        %v491 = vpack.c.bf16 %v490, %v490
        %v492 = vld [vmem:[%s4] sm:$0x3]
        %v493 = vld [vmem:[%s5] sm:$0xf]
        %495 = vset.pattern.permute.xlu0 0
        %496 = vperm.xlu0 %495, %v493
        %v497 = vpop.permute.xlu0 %496
        %v500 = vsel %vm342, %v492, 0
        %v503 = vsel %vm346, %v491, 0
        %505 = vmatprep.subr.bf16.mxu0 0
        %506 = vmatpush1.bf16.msra.mxu0 %v503
        %507 = vmatprep.subr.bf16.mxu0 0
        %508 = vmatpush1.bf16.msra.mxu0 0
        %509 = vmatprep.subr.bf16.mxu0 0
        %510 = vmatpush1.bf16.msra.mxu0 0
        %511 = vmatprep.subr.bf16.mxu0 0
        %512 = vmatpush1.bf16.msra.mxu0 0
        %513 = vmatprep.subr.bf16.mxu0 0
        %514 = vmatpush1.bf16.msra.mxu0 0
        %515 = vmatprep.subr.bf16.mxu0 0
        %516 = vmatpush1.bf16.msra.mxu0 0
        %517 = vmatprep.subr.bf16.mxu0 0
        %518 = vmatpush1.bf16.msra.mxu0 0
        %519 = vmatprep.subr.bf16.mxu0 0
        %520 = vmatpush1.bf16.msra.mxu0 0
        %521 = vmatprep.subr.bf16.mxu0 0
        %522 = vmatpush1.bf16.msra.mxu0 0
        %523 = vmatprep.subr.bf16.mxu0 0
        %524 = vmatpush1.bf16.msra.mxu0 0
        %525 = vmatprep.subr.bf16.mxu0 0
        %526 = vmatpush1.bf16.msra.mxu0 0
        %527 = vmatprep.subr.bf16.mxu0 0
        %528 = vmatpush1.bf16.msra.mxu0 0
        %529 = vmatprep.subr.bf16.mxu0 0
        %530 = vmatpush1.bf16.msra.mxu0 0
        %531 = vmatprep.subr.bf16.mxu0 0
        %532 = vmatpush1.bf16.msra.mxu0 0
        %533 = vmatprep.subr.bf16.mxu0 0
        %534 = vmatpush1.bf16.msra.mxu0 0
        %535 = vmatprep.subr.bf16.mxu0 0
        %536 = vmatpush1.bf16.msra.mxu0 0
        %537 = vmatprep.mubr.bf16.mxu0 0
        %538 = vmatmul.mubr.bf16.gmra.mrb[0].mxu0 %v500
        %v539 = vpop.f32.mrb[0].mxu0
        %v540 = vadd.f32 %v497, %v539
        %v541 = vpop.f32.mrb[0].mxu0
        %v542 = vpop.f32.mrb[0].mxu0
        %v543 = vpop.f32.mrb[0].mxu0
        %544 = vdwg.mxu0
        %v545 = vadd.f32 %v313, %v540
        %546 = vst [vmem:[%s304] sm:$0xf] %v545
        %s547 = sand.u32 %s185, 1
        %s548 = scalar_lea.sflag [#allocation4], %s547
        %s549 = sand.u32 %s185, 1
        %s550 = smul.addr %s549, 4
        %s551 = scalar_lea.vmem [#allocation5], %s550
        // Predicated region
        $region49: #{tpu_custom_call.1} parent=43 // pred_check
          %p552 = pneg %p195
        $region50: #{tpu_custom_call.1} parent=43 // pred_check_branch
          %554 = sbr.rel (%p552) target = $region52
        $region51: #{tpu_custom_call.1} parent=43 // pred_region
          %s556 = ssub.s32 64, 64
          %557 = vsyncadd %s548, %s556
          %s558 = sadd.s32 %s28, %s27
          %s559 = smul.addr %s558, 64
          %s560 = scalar_lea.hbm %s6, %s559
          %s562 = sshll.u32 %s551, 4
          %s563 = int_to_ptr.vmem [resolvable:$true] %s562
          %565 = dma.vmem_to_hbm [thread:$0]  %s563, 64, %s560, %s548
        $region52: #{tpu_custom_call.1} parent=43 // pred_fallthru
          _
      $region44: #{tpu_custom_call.1} parent=5 // pred_fallthru
        _
      %p566 = scmp.le.s32.totalorder 2, %s18
      // Predicated region
      $region53: #{tpu_custom_call.1} parent=5 // pred_check
        %p567 = pneg %p566
      $region54: #{tpu_custom_call.1} parent=5 // pred_check_branch
        %569 = sbr.rel (%p567) target = $region56
      $region55: #{tpu_custom_call.1} parent=5 // pred_region
        %s570 = ssub.s32 %s18, 2
        // Predicated region
        $region57: #{tpu_custom_call.1} parent=55 // pred_check
          %p571 = pneg %p201
        $region58: #{tpu_custom_call.1} parent=55 // pred_check_branch
          %573 = sbr.rel (%p571) target = $region60
        $region59: #{tpu_custom_call.1} parent=55 // pred_region
          %s574 = sand.u32 %s186, 1
          %s575 = scalar_lea.sflag [#allocation4], %s574
          %s576 = sand.u32 %s186, 1
          %s577 = smul.addr %s576, 4
          %s578 = scalar_lea.vmem [#allocation5], %s577
          %579 = dma.done %s575, 64
        $region60: #{tpu_custom_call.1} parent=55 // pred_fallthru
          _
      $region56: #{tpu_custom_call.1} parent=5 // pred_fallthru
        _
    $region6: #{tpu_custom_call.1} parent=1 // loop_footer
      %s22 = sadd.s32 1, %s18
    $region7: #{tpu_custom_call.1} parent=1 // loop_footer_branch
      %17 = sbr.rel target = $region3
    $region8: #{tpu_custom_call.1} parent=1 // loop_exit
      _
    %580 = vsyncpa [#allocation3], 1
    %s581 = scalar_lea.sflag [#allocation3], 1
    %582 = vsyncpa %s581, 1
    %583 = vsyncpa [#allocation4], 1
    %s584 = scalar_lea.sflag [#allocation4], 1
    %585 = vsyncpa %s584, 1

</llo_original>
